<compile_context>
chip_gen: v6e
topology: v6e:2x2x1
jax: 0.10.0
libtpu: 0.0.40
codegen_flags: <defaults>
</compile_context>

<pallas_src>
import functools
import math

import jax
import jax.numpy as jnp
from jax import lax
from jax.experimental import pallas as pl
from jax.experimental.pallas import tpu as pltpu


def _embed_kernel(ids_ref, table_ref, out_ref, *, scale):
    # ids_ref:   VMEM (block_t, 1) int32 token ids for this block
    # table_ref: VMEM (vocab, d_model) embedding table (resident, block (0,0)
    #            every step -> DMA'd from HBM once, single-buffered)
    # out_ref:   VMEM (block_t, d_model) float32 output slab
    block_t = out_ref.shape[0]
    vocab = table_ref.shape[0]

    ids = ids_ref[...]                                              # (block_t, 1)
    iota = lax.broadcasted_iota(jnp.int32, (block_t, vocab), 1)     # (block_t, vocab)
    onehot = (iota == ids).astype(table_ref.dtype)                  # MXU-native dtype

    # One-hot gather on the MXU; accumulate in f32 regardless of table dtype.
    rows = jnp.dot(onehot, table_ref[...], preferred_element_type=jnp.float32)
    out_ref[...] = rows * scale


def input_embedding(x, embedding_table, *, block_t=512):
    """x: int (batch, seq) token ids; embedding_table: (vocab, d_model).

    Returns float32 (batch, seq, d_model) = table[x] * sqrt(d_model).
    """
    batch, seq = x.shape
    vocab, d_model = embedding_table.shape
    n_tokens = batch * seq

    # Shrink the token block for tiny inputs; keep it sublane-aligned (x8).
    block_t = min(block_t, max(8, ((n_tokens + 7) // 8) * 8))
    n_blocks = pl.cdiv(n_tokens, block_t)
    n_pad = n_blocks * block_t

    ids = x.reshape(n_tokens).astype(jnp.int32)
    if n_pad != n_tokens:
        ids = jnp.pad(ids, (0, n_pad - n_tokens))   # pad ids are 0 -> row 0, sliced off
    ids = ids.reshape(n_pad, 1)

    scale = float(math.sqrt(d_model))   # Python literal -> no captured consts

    # VMEM budget: single-buffered table + double-buffered ids/output + headroom.
    table_bytes = vocab * d_model * embedding_table.dtype.itemsize
    io_bytes = 2 * (block_t * 4 + block_t * d_model * 4)
    vmem_limit = int(1.25 * (table_bytes + io_bytes)) + (2 << 20)
    vmem_limit = max(vmem_limit, 4 << 20)
    vmem_limit = min(vmem_limit, 48 << 20)   # never request all of v7x's 64 MiB/core

    out_flat = pl.pallas_call(
        functools.partial(_embed_kernel, scale=scale),
        out_shape=jax.ShapeDtypeStruct((n_pad, d_model), jnp.float32),
        grid=(n_blocks,),
        in_specs=[
            # Token ids for this block, pipelined with the grid.
            pl.BlockSpec((block_t, 1), lambda i: (i, 0)),
            # Whole table resident in VMEM; constant block -> single-buffer it.
            pl.BlockSpec((vocab, d_model), lambda i: (0, 0),
                         pipeline_mode=pl.Buffered(1)),
        ],
        out_specs=pl.BlockSpec((block_t, d_model), lambda i: (i, 0)),
        compiler_params=pltpu.CompilerParams(
            dimension_semantics=("parallel",),
            vmem_limit_bytes=vmem_limit,
        ),
    )(ids, embedding_table)

    return out_flat[:n_tokens].reshape(batch, seq, d_model)


if __name__ == "__main__":
    d_model = 32
    seq_len = 8   # vocabulary size of nn.Embedding(seq_len, d_model)
    batch = 2
    seq = 8

    key = jax.random.PRNGKey(0)
    k_emb, k_ids = jax.random.split(key)

    # nn.Embedding default init is N(0, 1).
    embedding_table = jax.random.normal(
        k_emb, (seq_len, d_model), dtype=jnp.float32
    )
    # Token ids in [0, seq_len).
    x = jax.random.randint(k_ids, (batch, seq), 0, seq_len, dtype=jnp.int32)

    out = input_embedding(x, embedding_table)
    out = jax.block_until_ready(out)

    # Reference check (plain JAX gather + scale). Tolerance allows for the
    # MXU's internal f32->bf16 pass handling in the one-hot matmul.
    ref = embedding_table[x] * math.sqrt(d_model)
    assert out.shape == (batch, seq, d_model)
    assert out.dtype == jnp.float32
    assert jnp.allclose(out, ref, rtol=5e-3, atol=1e-5), "mismatch vs reference"

    print("KERNEL_OK")
</pallas_src>

<mosaic_0001>
module attributes {stable_mosaic.version = 11 : i64} {
  func.func @_embed_kernel(%arg0: i32, %arg1: memref<16x1xi32, #tpu.memory_space<vmem>>, %arg2: memref<8x32xf32, #tpu.memory_space<vmem>>, %arg3: memref<16x32xf32, #tpu.memory_space<vmem>>) attributes {dimension_semantics = [#tpu.dimension_semantics<parallel>], iteration_bounds = array<i64: 1>, scalar_prefetch = 0 : i64, scratch_operands = 0 : i64, tpu.core_type = #tpu.core_type<tc>, window_params = [{transform_indices = @transform_0, window_bounds = array<i64: 16, 1>}, {pipeline_mode = #tpu.pipeline_mode<synchronous>, transform_indices = @transform_1, window_bounds = array<i64: 8, 32>}, {transform_indices = @transform_2, window_bounds = array<i64: 16, 32>}]} {
    %c0 = arith.constant 0 : index
    %c0_0 = arith.constant 0 : index
    %0 = vector.load %arg1[%c0, %c0_0] : memref<16x1xi32, #tpu.memory_space<vmem>>, vector<16x1xi32>
    %1 = tpu.iota {dimensions = array<i32: 1>} : vector<16x8xi32>
    %2 = vector.broadcast %0 : vector<16x1xi32> to vector<16x8xi32>
    %3 = arith.cmpi eq, %1, %2 : vector<16x8xi32>
    %4 = arith.extui %3 : vector<16x8xi1> to vector<16x8xi32>
    %5 = arith.sitofp %4 : vector<16x8xi32> to vector<16x8xf32>
    %c0_1 = arith.constant 0 : index
    %c0_2 = arith.constant 0 : index
    %6 = vector.load %arg2[%c0_1, %c0_2] : memref<8x32xf32, #tpu.memory_space<vmem>>, vector<8x32xf32>
    %cst = arith.constant dense<0.000000e+00> : vector<16x32xf32>
    %7 = tpu.matmul %5, %6, %cst {dimension_numbers = #tpu.dot_dimension_numbers<[1], [0], [0], [1], [0, 0, 1, 1], [], []>} : vector<16x8xf32>, vector<8x32xf32>, vector<16x32xf32> -> vector<16x32xf32>
    %cst_3 = arith.constant 5.65685415 : f32
    %8 = vector.broadcast %cst_3 : f32 to vector<16x32xf32>
    %9 = arith.mulf %7, %8 : vector<16x32xf32>
    %c0_4 = arith.constant 0 : index
    %c0_5 = arith.constant 0 : index
    %10 = vector.load %arg3[%c0_4, %c0_5] : memref<16x32xf32, #tpu.memory_space<vmem>>, vector<16x32xf32>
    tpu.vector_store %arg3[%c0_4, %c0_5], %9 {strides = array<i32>} : memref<16x32xf32, #tpu.memory_space<vmem>>, vector<16x32xf32>,
    return
  }
  func.func @transform_0(%arg0: i32) -> (i32, i32) {
    %c0_i32 = arith.constant 0 : i32
    %c0_i32_0 = arith.constant 0 : i32
    return %arg0, %c0_i32 : i32, i32
  }
  func.func @transform_1(%arg0: i32) -> (i32, i32) {
    %c0_i32 = arith.constant 0 : i32
    %c0_i32_0 = arith.constant 0 : i32
    %c0_i32_1 = arith.constant 0 : i32
    return %c0_i32, %c0_i32_0 : i32, i32
  }
  func.func @transform_2(%arg0: i32) -> (i32, i32) {
    %c0_i32 = arith.constant 0 : i32
    %c0_i32_0 = arith.constant 0 : i32
    return %arg0, %c0_i32 : i32, i32
  }
}

</mosaic_0001>

<llo_original>
// kernel: tpu_custom_call.1
$region0: #{tpu_custom_call.1}
  #allocation0 [shape = 'u32[]', space=smem, size = 0x4, offset = 0x4, fixed_abs, tag = 'smem constant byte address 0x4 - core index']
  #allocation1 [shape = 'u32[144,128]{1,0:T(1,128)}', space=vmem, size = 0x12000, scoped, tag = 'internal scratch']
  %s0 = inlined_call_operand.vmem [shape: s32[16,1], index: 0, kind: input, shape index: {}]
  %s1 = inlined_call_operand.vmem [shape: f32[8,32], index: 1, kind: input, shape index: {}]
  %s2 = inlined_call_operand.hbm [shape: f32[16,32], index: 2, kind: output, shape index: {}]
  %s3 = sld [smem:[#allocation0]]
  $region18: #{tpu_custom_call.1} parent=0
    _
  %s5 = ssub.s32 1, %s3
  %s6 = scalar_select 0, %s5, %s3
  $region1: #{tpu_custom_call.1} parent=0
    #allocation2 [shape = 'u8[8192]{0}', space=vmem, size = 0x2000, scoped, tag = 'output window, operand 0, single buffered']
    #allocation3 [shape = 's32[1]{0}', space=sflag, size = 0x4, scoped, tag = 'scoped memory for tpu_custom_call.1']
    %7 = vsyncpa [#allocation3], 0
    // Predicated region
    $region2: #{tpu_custom_call.1} parent=1 // pred_check
      _
    $region3: #{tpu_custom_call.1} parent=1 // pred_check_branch
      %9 = sbr.rel (0) target = $region5
    $region4: #{tpu_custom_call.1} parent=1 // pred_region
      _
    $region5: #{tpu_custom_call.1} parent=1 // pred_fallthru
      _
    // Predicated region
    $region6: #{tpu_custom_call.1} parent=1 // pred_check
      _
    $region7: #{tpu_custom_call.1} parent=1 // pred_check_branch
      %11 = sbr.rel (0) target = $region9
    $region8: #{tpu_custom_call.1} parent=1 // pred_region
      _
    $region9: #{tpu_custom_call.1} parent=1 // pred_fallthru
      _
    %v12 = vld [vmem:[%s0] sm:$0xff]
    %v13 = vld [vmem:[%s0 + $0x8] sm:$0xff]
    %v14 = vlaneseq
    %v15 = vand.u32 %v14, 127
    %16 = vset.pattern.permute.xlu0 0
    %17 = vperm.xlu0 %16, %v12
    %v18 = vpop.permute.xlu0 %17
    %19 = vset.pattern.permute.xlu0 0
    %20 = vperm.xlu0 %19, %v13
    %v21 = vpop.permute.xlu0 %20
    %vm22 = vcmp.eq.s32.totalorder %v15, %v18
    %vm23 = vcmp.eq.s32.totalorder %v15, %v21
    %v24 = vsel %vm22, 1, 0
    %v25 = vsel %vm23, 1, 0
    %v26 = vcvt.s32.f32 %v24
    %v27 = vcvt.s32.f32 %v25
    %v28 = vld [vmem:[%s1] sm:$0xff]
    %vm29 = vcmask 64512
    %v31 = vsel %vm29, %v26, 0
    %v34 = vsel %vm29, %v27, 0
    %36 = vmatprep.subr.mxu0 0.0
    %37 = vmatpush1.msra.mxu0 0.0
    %38 = vmatprep.subr.mxu0 0.0
    %39 = vmatpush1.msra.mxu0 0.0
    %40 = vmatprep.subr.mxu0 0.0
    %41 = vmatpush1.msra.mxu0 0.0
    %42 = vmatprep.subr.mxu0 0.0
    %43 = vmatpush1.msra.mxu0 0.0
    %44 = vmatprep.subr.mxu0 0.0
    %45 = vmatpush1.msra.mxu0 0.0
    %46 = vmatprep.subr.mxu0 0.0
    %47 = vmatpush1.msra.mxu0 0.0
    %48 = vmatprep.subr.mxu0 0.0
    %49 = vmatpush1.msra.mxu0 0.0
    %50 = vmatprep.subr.mxu0 0.0
    %51 = vmatpush1.msra.mxu0 0.0
    %52 = vmatprep.subr.mxu0 0.0
    %53 = vmatpush1.msra.mxu0 0.0
    %54 = vmatprep.subr.mxu0 0.0
    %55 = vmatpush1.msra.mxu0 0.0
    %56 = vmatprep.subr.mxu0 0.0
    %57 = vmatpush1.msra.mxu0 0.0
    %58 = vmatprep.subr.mxu0 0.0
    %59 = vmatpush1.msra.mxu0 0.0
    %60 = vmatprep.subr.mxu0 0.0
    %61 = vmatpush1.msra.mxu0 0.0
    %62 = vmatprep.subr.mxu0 0.0
    %63 = vmatpush1.msra.mxu0 0.0
    %64 = vmatprep.subr.mxu0 0.0
    %65 = vmatpush1.msra.mxu0 0.0
    %66 = vmatprep.subr.mxu0 0.0
    %67 = vmatpush1.msra.mxu0 %v28
    %68 = vmatprep.subr.mxu0 0.0
    %69 = vmatpush2.msra.mxu0 0.0
    %70 = vmatprep.subr.mxu0 0.0
    %71 = vmatpush2.msra.mxu0 0.0
    %72 = vmatprep.subr.mxu0 0.0
    %73 = vmatpush2.msra.mxu0 0.0
    %74 = vmatprep.subr.mxu0 0.0
    %75 = vmatpush2.msra.mxu0 0.0
    %76 = vmatprep.subr.mxu0 0.0
    %77 = vmatpush2.msra.mxu0 0.0
    %78 = vmatprep.subr.mxu0 0.0
    %79 = vmatpush2.msra.mxu0 0.0
    %80 = vmatprep.subr.mxu0 0.0
    %81 = vmatpush2.msra.mxu0 0.0
    %82 = vmatprep.subr.mxu0 0.0
    %83 = vmatpush2.msra.mxu0 0.0
    %84 = vmatprep.subr.mxu0 0.0
    %85 = vmatpush2.msra.mxu0 0.0
    %86 = vmatprep.subr.mxu0 0.0
    %87 = vmatpush2.msra.mxu0 0.0
    %88 = vmatprep.subr.mxu0 0.0
    %89 = vmatpush2.msra.mxu0 0.0
    %90 = vmatprep.subr.mxu0 0.0
    %91 = vmatpush2.msra.mxu0 0.0
    %92 = vmatprep.subr.mxu0 0.0
    %93 = vmatpush2.msra.mxu0 0.0
    %94 = vmatprep.subr.mxu0 0.0
    %95 = vmatpush2.msra.mxu0 0.0
    %96 = vmatprep.subr.mxu0 0.0
    %97 = vmatpush2.msra.mxu0 0.0
    %98 = vmatprep.subr.mxu0 0.0
    %99 = vmatpush2.msra.mxu0 0.0
    %100 = vmatprep.mubr.f32.mxu0 0.0
    %101 = vmatmul.mubr.f32.gmra.mxu0 %v31
    %v102 = vpop.f32.mrf.mxu0
    %v103 = vadd.f32 0.0, %v102
    %v104 = vpop.f32.mrf.mxu0
    %105 = vmatprep.mubr.f32.mxu0 0.0
    %106 = vmatmul.mubr.f32.gmra.mxu0 %v34
    %v107 = vpop.f32.mrf.mxu0
    %v108 = vadd.f32 0.0, %v107
    %v109 = vpop.f32.mrf.mxu0
    %110 = vdwg.mxu0
    %v111 = vmul.f32 %v103, 5.656854
    %v112 = vmul.f32 %v108, 5.656854
    %vm113 = vcmask 261120
    %114 = vst.msk [vmem:[#allocation2] sm:$0xff] %vm113, %v111
    %115 = vst.msk [vmem:[#allocation2 + $0x8] sm:$0xff] %vm113, %v112
    // Predicated region
    $region10: #{tpu_custom_call.1} parent=1 // pred_check
      _
    $region11: #{tpu_custom_call.1} parent=1 // pred_check_branch
      %117 = sbr.rel (0) target = $region13
    $region12: #{tpu_custom_call.1} parent=1 // pred_region
      %s119 = ssub.s32 256, 256
      %120 = vsyncadd [#allocation3], %s119
      %s121 = sshll.u32 [#allocation2], 4
      %s122 = int_to_ptr.vmem [resolvable:$true] %s121
      %127 = dma.vmem_to_hbm [thread:$0]  %s122, 256, %s2, [#allocation3], 128, 128, 8
    $region13: #{tpu_custom_call.1} parent=1 // pred_fallthru
      _
    // Predicated region
    $region14: #{tpu_custom_call.1} parent=1 // pred_check
      _
    $region15: #{tpu_custom_call.1} parent=1 // pred_check_branch
      %129 = sbr.rel (0) target = $region17
    $region16: #{tpu_custom_call.1} parent=1 // pred_region
      %130 = dma.done [#allocation3], 256
    $region17: #{tpu_custom_call.1} parent=1 // pred_fallthru
      _
    %131 = vsyncpa [#allocation3], 1

</llo_original>
